<compile_context>
chip_gen: v7x
topology: tpu7x:2x2x1
jax: 0.10.0
libtpu: 0.0.40
codegen_flags: <defaults>
</compile_context>

<pallas_src>
import functools

import jax
import jax.numpy as jnp
import numpy as np
from jax.experimental import pallas as pl
from jax.experimental.pallas import tpu as pltpu

# ---- "opt" hyper-parameters (deterministic, in-script) ---------------------
MARGIN = 0.5      # opt.margin
LYMBDA = 1.0      # opt.lymbda
OPT_INTS = 1      # opt.ints
OPT_CTX = 1       # opt.ctx
N_RELS = 8        # n_rels: label == N_RELS means "no relation" (excluded)


def _round_up(x, m):
    return ((x + m - 1) // m) * m


def _max_margin_kernel(slab_ref, lab_ref, out_ref,
                       int_acc, ctx_acc, cnt_acc, *,
                       margin, lymbda, n_rels, c_int, c_rel, batch,
                       ints_on, ctx_on):
    """One batch tile of the multi-task max-margin loss.

    slab_ref: (3, C_max, TILE_B) f32/bf16 -- planes [intent logits; relation
              logits (class-padded); multilab 0/1 mask].  Classes on sublanes,
              batch entries on lanes (dense vregs).
    lab_ref : (2, TILE_B) i32             -- [intent target; relation target].
    out_ref : (1, 1) f32 in SMEM          -- scalar loss (written on last step).
    int_acc/ctx_acc/cnt_acc: (1, TILE_B) f32 VMEM lane-resident accumulators.
    """
    step = pl.program_id(0)
    c_max, tb = slab_ref.shape[1], slab_ref.shape[2]

    @pl.when(step == 0)
    def _init():
        int_acc[...] = jnp.zeros_like(int_acc)
        ctx_acc[...] = jnp.zeros_like(ctx_acc)
        cnt_acc[...] = jnp.zeros_like(cnt_acc)

    # Validity of each batch lane in this tile (padded tail rows excluded).
    lane = jax.lax.broadcasted_iota(jnp.int32, (1, tb), 1)
    row_valid = (step * tb + lane) < batch                       # (1, TB)
    cls = jax.lax.broadcasted_iota(jnp.int32, (c_max, tb), 0)    # class idx / sublane
    lab = lab_ref[...]                                           # (2, TB)

    def sigmoid(x):
        return 0.5 * (jnp.tanh(0.5 * x) + 1.0)                   # single EUP op

    # Both logit planes are contiguous -> one EUP chain for both sigmoids.
    if ints_on and ctx_on:
        sig_all = sigmoid(slab_ref[0:2].astype(jnp.float32))     # (2, C_max, TB)
        sig_i, sig_r = sig_all[0], sig_all[1]
    elif ints_on:
        sig_i, sig_r = sigmoid(slab_ref[0].astype(jnp.float32)), None
    elif ctx_on:
        sig_i, sig_r = None, sigmoid(slab_ref[1].astype(jnp.float32))
    else:
        sig_i = sig_r = None

    if ints_on:
        mlw = slab_ref[2].astype(jnp.float32)                    # 0/1 mask (binary contract)
        ilab = lab[0:1, :]                                       # (1, TB)
        is_tgt = cls == ilab
        pos = jnp.sum(jnp.where(is_tgt, sig_i, 0.0), axis=0, keepdims=True)   # (1, TB)
        neg_ok = jnp.logical_and(jnp.logical_not(is_tgt), mlw > 0.0)
        neg_ok = jnp.logical_and(neg_ok,
                                 jnp.logical_and(row_valid, cls < c_int))
        hinge = jnp.where(neg_ok, jnp.maximum((margin - pos) + sig_i, 0.0), 0.0)
        int_acc[...] += jnp.sum(hinge, axis=0, keepdims=True)    # class-axis reduce only

    if ctx_on:
        rlab = lab[1:2, :]                                       # (1, TB)
        valid = jnp.logical_and(rlab != n_rels, row_valid)       # valid relation rows
        is_tgt_r = cls == rlab
        pos_r = jnp.sum(jnp.where(is_tgt_r, sig_r, 0.0), axis=0, keepdims=True)
        neg_ok_r = jnp.logical_and(jnp.logical_not(is_tgt_r), valid)
        neg_ok_r = jnp.logical_and(neg_ok_r, cls < c_rel)        # mask class padding
        hinge_r = jnp.where(neg_ok_r, jnp.maximum((margin - pos_r) + sig_r, 0.0), 0.0)
        ctx_acc[...] += jnp.sum(hinge_r, axis=0, keepdims=True)
        cnt_acc[...] += jnp.where(valid, 1.0, 0.0)

    @pl.when(step == pl.num_programs(0) - 1)
    def _finish():
        # Single cross-lane reduction + scalar SMEM store, once per call.
        int_sum = jnp.sum(int_acc[...], keepdims=True)           # (1, 1)
        ctx_sum = jnp.sum(ctx_acc[...], keepdims=True)
        cnt = jnp.sum(cnt_acc[...], keepdims=True)
        loss = int_sum * (lymbda / batch)                        # sum/B == sum(1).mean()
        loss = loss + jnp.where(cnt > 0.0,
                                ctx_sum / jnp.maximum(cnt, 1.0),
                                jnp.zeros_like(cnt))
        out_ref[0, 0] = loss[0, 0]


@functools.partial(jax.jit, static_argnames=("margin", "lymbda", "n_rels", "tile_b"))
def multitask_max_margin(x_inters, labels, multilab_weights, rels, rels_label,
                         *, margin=MARGIN, lymbda=LYMBDA, n_rels=N_RELS,
                         tile_b=None):
    """JAX wrapper mirroring MultiTaskMaxMargin.forward.

    x_inters        : (batch * seq, C_int) intent logits (f32 or bf16)
    labels          : (batch, seq) int targets
    multilab_weights: (batch, C_int) 0/1 weights (float / int8 / bool)
    rels            : (batch, C_rel) relation logits (f32 or bf16)
    rels_label      : (batch,) int relation targets (== n_rels -> skip row)
    Returns loss of shape (1,), like torch.Tensor([0]) + ...
    """
    batch = rels_label.shape[0]
    c_int = x_inters.shape[-1]
    c_rel = rels.shape[-1]
    c_max = max(c_int, c_rel)

    # glue mandated by the module: x['inters'].view(batch,-1,C)[:,0], labels[:,0]
    inters = x_inters.reshape(batch, -1, c_int)[:, 0]            # (B, Ci)
    target = labels[:, 0]                                        # (B,)

    # Adaptive batch tile (feedback: 512-2048 lanes for large batches).
    if tile_b is None:
        tile_b = min(1024, _round_up(batch, 128))
    tile_b = max(128, _round_up(int(tile_b), 128))
    num_tiles = pl.cdiv(batch, tile_b)
    b_pad = num_tiles * tile_b

    # Keep the slab in the incoming logit dtype (bf16 stays bf16 -> half the
    # DMA bytes); the kernel upcasts to f32 after the load.
    slab_dtype = jnp.promote_types(inters.dtype, rels.dtype)
    if not jnp.issubdtype(slab_dtype, jnp.floating):
        slab_dtype = jnp.float32

    def plane(x):
        x = x.astype(slab_dtype)
        return jnp.pad(x, ((0, b_pad - x.shape[0]), (0, c_max - x.shape[1])))

    # Consolidated slab, batch on lanes: (3, C_max, B_pad), planes
    # [inters, rels, mlw] so the two logit planes are contiguous.
    slab = jnp.stack([plane(inters), plane(rels),
                      plane(multilab_weights)]).transpose(0, 2, 1)

    # Consolidated i32 label slab: (2, B_pad).  Padded rows are neutralized by
    # the in-kernel row-validity mask regardless of pad values.
    ilab = jnp.pad(target.astype(jnp.int32), (0, b_pad - batch))
    rlab = jnp.pad(rels_label.astype(jnp.int32), (0, b_pad - batch),
                   constant_values=n_rels)
    lab = jnp.stack([ilab, rlab])

    kernel = functools.partial(
        _max_margin_kernel, margin=float(margin), lymbda=float(lymbda),
        n_rels=int(n_rels), c_int=int(c_int), c_rel=int(c_rel),
        batch=int(batch), ints_on=(OPT_INTS == 1), ctx_on=(OPT_CTX == 1))

    out = pl.pallas_call(
        kernel,
        out_shape=jax.ShapeDtypeStruct((1, 1), jnp.float32),
        grid_spec=pltpu.PrefetchScalarGridSpec(
            num_scalar_prefetch=0,
            grid=(num_tiles,),
            in_specs=[
                pl.BlockSpec((3, c_max, tile_b), lambda i: (0, 0, i)),
                pl.BlockSpec((2, tile_b), lambda i: (0, i)),
            ],
            out_specs=pl.BlockSpec(memory_space=pltpu.MemorySpace.SMEM),
            scratch_shapes=[pltpu.VMEM((1, tile_b), jnp.float32),
                            pltpu.VMEM((1, tile_b), jnp.float32),
                            pltpu.VMEM((1, tile_b), jnp.float32)],
        ),
        compiler_params=pltpu.CompilerParams(
            # Grid axis carries the resident accumulators -> reduction axis.
            # TODO(synk): v7x dual-TC split via a parallel axis + partial sums.
            dimension_semantics=("arbitrary",),
            # Let XLA fuse the slab pad/stack/transpose into the kernel inputs
            # instead of a separate full-HBM pass.
            allow_input_fusion=[True, True],
        ),
    )(slab, lab)
    return out.reshape(1)


# ---- pure numpy reference (mirrors the PyTorch code path) ------------------
def _reference(x_inters, labels, mlw, rels, rels_label,
               margin=MARGIN, lymbda=LYMBDA, n_rels=N_RELS):
    loss = 0.0
    batch = rels_label.shape[0]
    c_int = x_inters.shape[-1]
    if OPT_INTS == 1:
        inters = x_inters.reshape(batch, -1, c_int)[:, 0]
        target = labels[:, 0]
        neg_mask = np.ones_like(inters)
        neg_mask[np.arange(batch), target] = 0.0
        neg_mask = neg_mask * mlw
        sig = 1.0 / (1.0 + np.exp(-inters))
        pos = sig[np.arange(batch), target]
        hinge = np.maximum((margin - pos)[:, None] + sig * neg_mask, 0.0) * neg_mask
        loss += lymbda * hinge.sum(1).mean()
    if OPT_CTX == 1:
        keep = np.nonzero(rels_label - n_rels)[0]
        if keep.shape[0]:
            tr = rels_label[keep]
            r = rels[keep]
            m = keep.shape[0]
            neg_mask = np.ones_like(r)
            neg_mask[np.arange(m), tr] = 0.0
            sig = 1.0 / (1.0 + np.exp(-r))
            pos = sig[np.arange(m), tr]
            hinge = np.maximum((margin - pos)[:, None] + sig * neg_mask, 0.0) * neg_mask
            loss += hinge.sum(1).mean()
    return np.array([loss], dtype=np.float32)


if __name__ == "__main__":
    def make_inputs(batch, seq, c_int, c_rel, key):
        k1, k2, k3, k4, k5 = jax.random.split(key, 5)
        x_inters = jax.random.normal(k1, (batch * seq, c_int), jnp.float32)
        labels = jax.random.randint(k2, (batch, seq), 0, c_int, jnp.int32)
        mlw = jax.random.bernoulli(k3, 0.7, (batch, c_int)).astype(jnp.float32)
        rels = jax.random.normal(k4, (batch, c_rel), jnp.float32)
        rels_label = jax.random.randint(k5, (batch,), 0, N_RELS + 1, jnp.int32)
        # guarantee both a skipped ("no relation") row and valid rows
        rels_label = rels_label.at[0].set(N_RELS).at[1].set(0)
        return x_inters, labels, mlw, rels, rels_label

    def check(out, x_inters, labels, mlw, rels, rels_label, rtol, atol):
        ref = _reference(np.asarray(x_inters.astype(jnp.float32)),
                         np.asarray(labels), np.asarray(mlw, dtype=np.float32),
                         np.asarray(rels.astype(jnp.float32)),
                         np.asarray(rels_label))
        np.testing.assert_allclose(np.asarray(out), ref, rtol=rtol, atol=atol)

    key = jax.random.PRNGKey(0)
    k_a, k_b, k_c = jax.random.split(key, 3)

    # 1) small batch, single tile, f32 path
    xi, lb, mw, rl, rlab = make_inputs(batch=8, seq=4, c_int=16, c_rel=N_RELS, key=k_a)
    out = jax.block_until_ready(multitask_max_margin(xi, lb, mw, rl, rlab))
    check(out, xi, lb, mw, rl, rlab, rtol=5e-5, atol=1e-5)

    # 2) multi-tile grid path with a padded tail (tile_b forced small), f32
    xi, lb, mw, rl, rlab = make_inputs(batch=200, seq=3, c_int=16, c_rel=N_RELS, key=k_b)
    out = jax.block_until_ready(
        multitask_max_margin(xi, lb, mw, rl, rlab, tile_b=128))
    check(out, xi, lb, mw, rl, rlab, rtol=5e-5, atol=1e-5)

    # 3) reduced-bandwidth path: bf16 logits + int8 mask (slab stays bf16,
    #    kernel upcasts to f32); reference uses the same bf16-rounded logits.
    xi, lb, mw, rl, rlab = make_inputs(batch=256, seq=2, c_int=16, c_rel=N_RELS, key=k_c)
    xi16, rl16, mw8 = xi.astype(jnp.bfloat16), rl.astype(jnp.bfloat16), mw.astype(jnp.int8)
    out = jax.block_until_ready(
        multitask_max_margin(xi16, lb, mw8, rl16, rlab, tile_b=128))
    check(out, xi16, lb, mw, rl16, rlab, rtol=2e-4, atol=2e-5)

    print("KERNEL_OK")
</pallas_src>

<mosaic_0001>
module attributes {stable_mosaic.version = 11 : i64} {
  func.func @_max_margin_kernel(%arg0: i32, %arg1: memref<3x16x128xf32, #tpu.memory_space<vmem>>, %arg2: memref<2x128xi32, #tpu.memory_space<vmem>>, %arg3: memref<1x1xf32, #tpu.memory_space<smem>>, %arg4: memref<1x128xf32, #tpu.memory_space<vmem>>, %arg5: memref<1x128xf32, #tpu.memory_space<vmem>>, %arg6: memref<1x128xf32, #tpu.memory_space<vmem>>) attributes {dimension_semantics = [#tpu.dimension_semantics<arbitrary>], iteration_bounds = array<i64: 1>, scalar_prefetch = 0 : i64, scratch_operands = 3 : i64, tpu.core_type = #tpu.core_type<tc>, window_params = [{transform_indices = @transform_0, window_bounds = array<i64: 3, 16, 128>}, {transform_indices = @transform_1, window_bounds = array<i64: 2, 128>}, {transform_indices = @transform_2, window_bounds = array<i64: 1, 1>}]} {
    %c0_i32 = arith.constant 0 : i32
    %0 = arith.cmpi eq, %arg0, %c0_i32 : i32
    %1 = arith.extui %0 : i1 to i32
    %c0_i32_0 = arith.constant 0 : i32
    %2 = arith.cmpi ne, %1, %c0_i32_0 : i32
    scf.if %2 {
      %cst_42 = arith.constant 0.000000e+00 : f32
      %92 = vector.broadcast %cst_42 : f32 to vector<1x128xf32>
      %c0_43 = arith.constant 0 : index
      %c0_44 = arith.constant 0 : index
      %93 = vector.load %arg4[%c0_43, %c0_44] : memref<1x128xf32, #tpu.memory_space<vmem>>, vector<1x128xf32>
      tpu.vector_store %arg4[%c0_43, %c0_44], %92 {strides = array<i32>} : memref<1x128xf32, #tpu.memory_space<vmem>>, vector<1x128xf32>,
      %cst_45 = arith.constant 0.000000e+00 : f32
      %94 = vector.broadcast %cst_45 : f32 to vector<1x128xf32>
      %c0_46 = arith.constant 0 : index
      %c0_47 = arith.constant 0 : index
      %95 = vector.load %arg5[%c0_46, %c0_47] : memref<1x128xf32, #tpu.memory_space<vmem>>, vector<1x128xf32>
      tpu.vector_store %arg5[%c0_46, %c0_47], %94 {strides = array<i32>} : memref<1x128xf32, #tpu.memory_space<vmem>>, vector<1x128xf32>,
      %cst_48 = arith.constant 0.000000e+00 : f32
      %96 = vector.broadcast %cst_48 : f32 to vector<1x128xf32>
      %c0_49 = arith.constant 0 : index
      %c0_50 = arith.constant 0 : index
      %97 = vector.load %arg6[%c0_49, %c0_50] : memref<1x128xf32, #tpu.memory_space<vmem>>, vector<1x128xf32>
      tpu.vector_store %arg6[%c0_49, %c0_50], %96 {strides = array<i32>} : memref<1x128xf32, #tpu.memory_space<vmem>>, vector<1x128xf32>,
    } else {
    }
    %3 = tpu.iota {dimensions = array<i32: 1>} : vector<1x128xi32>
    %c128_i32 = arith.constant 128 : i32
    %4 = arith.muli %arg0, %c128_i32 : i32
    %5 = vector.broadcast %4 : i32 to vector<1x128xi32>
    %6 = arith.addi %5, %3 : vector<1x128xi32>
    %c8_i32 = arith.constant 8 : i32
    %7 = vector.broadcast %c8_i32 : i32 to vector<1x128xi32>
    %8 = arith.cmpi slt, %6, %7 : vector<1x128xi32>
    %9 = tpu.iota {dimensions = array<i32: 0>} : vector<16x128xi32>
    %c0 = arith.constant 0 : index
    %c0_1 = arith.constant 0 : index
    %10 = vector.load %arg2[%c0, %c0_1] : memref<2x128xi32, #tpu.memory_space<vmem>>, vector<2x128xi32>
    %c0_2 = arith.constant 0 : index
    %c0_3 = arith.constant 0 : index
    %c0_4 = arith.constant 0 : index
    %11 = vector.load %arg1[%c0_2, %c0_3, %c0_4] : memref<3x16x128xf32, #tpu.memory_space<vmem>>, vector<2x16x128xf32>
    %cst = arith.constant 5.000000e-01 : f32
    %12 = vector.broadcast %cst : f32 to vector<2x16x128xf32>
    %13 = arith.mulf %12, %11 : vector<2x16x128xf32>
    %14 = math.tanh %13 : vector<2x16x128xf32>
    %cst_5 = arith.constant 1.000000e+00 : f32
    %15 = vector.broadcast %cst_5 : f32 to vector<2x16x128xf32>
    %16 = arith.addf %14, %15 : vector<2x16x128xf32>
    %cst_6 = arith.constant 5.000000e-01 : f32
    %17 = vector.broadcast %cst_6 : f32 to vector<2x16x128xf32>
    %18 = arith.mulf %17, %16 : vector<2x16x128xf32>
    %19 = vector.extract_strided_slice %18 {offsets = [0, 0, 0], sizes = [1, 16, 128], strides = [1, 1, 1]} : vector<2x16x128xf32> to vector<1x16x128xf32>
    %20 = vector.shape_cast %19 : vector<1x16x128xf32> to vector<16x128xf32>
    %21 = vector.extract_strided_slice %18 {offsets = [1, 0, 0], sizes = [1, 16, 128], strides = [1, 1, 1]} : vector<2x16x128xf32> to vector<1x16x128xf32>
    %22 = vector.shape_cast %21 : vector<1x16x128xf32> to vector<16x128xf32>
    %c2 = arith.constant 2 : index
    %c0_7 = arith.constant 0 : index
    %c0_8 = arith.constant 0 : index
    %23 = vector.load %arg1[%c2, %c0_7, %c0_8] : memref<3x16x128xf32, #tpu.memory_space<vmem>>, vector<1x16x128xf32>
    %24 = vector.shape_cast %23 : vector<1x16x128xf32> to vector<16x128xf32>
    %25 = vector.extract_strided_slice %10 {offsets = [0, 0], sizes = [1, 128], strides = [1, 1]} : vector<2x128xi32> to vector<1x128xi32>
    %26 = vector.broadcast %25 : vector<1x128xi32> to vector<16x128xi32>
    %27 = arith.cmpi eq, %9, %26 : vector<16x128xi32>
    %cst_9 = arith.constant 0.000000e+00 : f32
    %28 = vector.broadcast %cst_9 : f32 to vector<16x128xf32>
    %29 = arith.select %27, %20, %28 : vector<16x128xi1>, vector<16x128xf32>
    %cst_10 = arith.constant dense<0.000000e+00> : vector<128xf32>
    %30 = vector.multi_reduction <add>, %29, %cst_10 [0] : vector<16x128xf32> to vector<128xf32>
    %31 = vector.shape_cast %30 : vector<128xf32> to vector<1x128xf32>
    %cst_11 = arith.constant dense<true> : vector<16x128xi1>
    %32 = arith.xori %27, %cst_11 : vector<16x128xi1>
    %cst_12 = arith.constant 0.000000e+00 : f32
    %33 = vector.broadcast %cst_12 : f32 to vector<16x128xf32>
    %34 = arith.cmpf ogt, %24, %33 : vector<16x128xf32>
    %35 = arith.andi %32, %34 : vector<16x128xi1>
    %c16_i32 = arith.constant 16 : i32
    %36 = vector.broadcast %c16_i32 : i32 to vector<16x128xi32>
    %37 = arith.cmpi slt, %9, %36 : vector<16x128xi32>
    %38 = vector.broadcast %8 : vector<1x128xi1> to vector<16x128xi1>
    %39 = arith.andi %38, %37 : vector<16x128xi1>
    %40 = arith.andi %35, %39 : vector<16x128xi1>
    %cst_13 = arith.constant 5.000000e-01 : f32
    %41 = vector.broadcast %cst_13 : f32 to vector<1x128xf32>
    %42 = arith.subf %41, %31 : vector<1x128xf32>
    %43 = vector.broadcast %42 : vector<1x128xf32> to vector<16x128xf32>
    %44 = arith.addf %43, %20 : vector<16x128xf32>
    %cst_14 = arith.constant 0.000000e+00 : f32
    %45 = vector.broadcast %cst_14 : f32 to vector<16x128xf32>
    %46 = arith.maximumf %44, %45 : vector<16x128xf32>
    %cst_15 = arith.constant 0.000000e+00 : f32
    %47 = vector.broadcast %cst_15 : f32 to vector<16x128xf32>
    %48 = arith.select %40, %46, %47 : vector<16x128xi1>, vector<16x128xf32>
    %c0_16 = arith.constant 0 : index
    %c0_17 = arith.constant 0 : index
    %49 = vector.load %arg4[%c0_16, %c0_17] : memref<1x128xf32, #tpu.memory_space<vmem>>, vector<1x128xf32>
    %cst_18 = arith.constant dense<0.000000e+00> : vector<128xf32>
    %50 = vector.multi_reduction <add>, %48, %cst_18 [0] : vector<16x128xf32> to vector<128xf32>
    %51 = vector.shape_cast %50 : vector<128xf32> to vector<1x128xf32>
    %52 = arith.addf %49, %51 : vector<1x128xf32>
    %c0_19 = arith.constant 0 : index
    %c0_20 = arith.constant 0 : index
    %53 = vector.load %arg4[%c0_19, %c0_20] : memref<1x128xf32, #tpu.memory_space<vmem>>, vector<1x128xf32>
    tpu.vector_store %arg4[%c0_19, %c0_20], %52 {strides = array<i32>} : memref<1x128xf32, #tpu.memory_space<vmem>>, vector<1x128xf32>,
    %54 = vector.extract_strided_slice %10 {offsets = [1, 0], sizes = [1, 128], strides = [1, 1]} : vector<2x128xi32> to vector<1x128xi32>
    %c8_i32_21 = arith.constant 8 : i32
    %55 = vector.broadcast %c8_i32_21 : i32 to vector<1x128xi32>
    %56 = arith.cmpi ne, %54, %55 : vector<1x128xi32>
    %57 = arith.andi %56, %8 : vector<1x128xi1>
    %58 = vector.broadcast %54 : vector<1x128xi32> to vector<16x128xi32>
    %59 = arith.cmpi eq, %9, %58 : vector<16x128xi32>
    %cst_22 = arith.constant 0.000000e+00 : f32
    %60 = vector.broadcast %cst_22 : f32 to vector<16x128xf32>
    %61 = arith.select %59, %22, %60 : vector<16x128xi1>, vector<16x128xf32>
    %cst_23 = arith.constant dense<0.000000e+00> : vector<128xf32>
    %62 = vector.multi_reduction <add>, %61, %cst_23 [0] : vector<16x128xf32> to vector<128xf32>
    %63 = vector.shape_cast %62 : vector<128xf32> to vector<1x128xf32>
    %cst_24 = arith.constant dense<true> : vector<16x128xi1>
    %64 = arith.xori %59, %cst_24 : vector<16x128xi1>
    %65 = vector.broadcast %57 : vector<1x128xi1> to vector<16x128xi1>
    %66 = arith.andi %64, %65 : vector<16x128xi1>
    %c8_i32_25 = arith.constant 8 : i32
    %67 = vector.broadcast %c8_i32_25 : i32 to vector<16x128xi32>
    %68 = arith.cmpi slt, %9, %67 : vector<16x128xi32>
    %69 = arith.andi %66, %68 : vector<16x128xi1>
    %cst_26 = arith.constant 5.000000e-01 : f32
    %70 = vector.broadcast %cst_26 : f32 to vector<1x128xf32>
    %71 = arith.subf %70, %63 : vector<1x128xf32>
    %72 = vector.broadcast %71 : vector<1x128xf32> to vector<16x128xf32>
    %73 = arith.addf %72, %22 : vector<16x128xf32>
    %cst_27 = arith.constant 0.000000e+00 : f32
    %74 = vector.broadcast %cst_27 : f32 to vector<16x128xf32>
    %75 = arith.maximumf %73, %74 : vector<16x128xf32>
    %cst_28 = arith.constant 0.000000e+00 : f32
    %76 = vector.broadcast %cst_28 : f32 to vector<16x128xf32>
    %77 = arith.select %69, %75, %76 : vector<16x128xi1>, vector<16x128xf32>
    %c0_29 = arith.constant 0 : index
    %c0_30 = arith.constant 0 : index
    %78 = vector.load %arg5[%c0_29, %c0_30] : memref<1x128xf32, #tpu.memory_space<vmem>>, vector<1x128xf32>
    %cst_31 = arith.constant dense<0.000000e+00> : vector<128xf32>
    %79 = vector.multi_reduction <add>, %77, %cst_31 [0] : vector<16x128xf32> to vector<128xf32>
    %80 = vector.shape_cast %79 : vector<128xf32> to vector<1x128xf32>
    %81 = arith.addf %78, %80 : vector<1x128xf32>
    %c0_32 = arith.constant 0 : index
    %c0_33 = arith.constant 0 : index
    %82 = vector.load %arg5[%c0_32, %c0_33] : memref<1x128xf32, #tpu.memory_space<vmem>>, vector<1x128xf32>
    tpu.vector_store %arg5[%c0_32, %c0_33], %81 {strides = array<i32>} : memref<1x128xf32, #tpu.memory_space<vmem>>, vector<1x128xf32>,
    %c0_34 = arith.constant 0 : index
    %c0_35 = arith.constant 0 : index
    %83 = vector.load %arg6[%c0_34, %c0_35] : memref<1x128xf32, #tpu.memory_space<vmem>>, vector<1x128xf32>
    %cst_36 = arith.constant 1.000000e+00 : f32
    %cst_37 = arith.constant 0.000000e+00 : f32
    %84 = vector.broadcast %cst_36 : f32 to vector<1x128xf32>
    %85 = vector.broadcast %cst_37 : f32 to vector<1x128xf32>
    %86 = arith.select %57, %84, %85 : vector<1x128xi1>, vector<1x128xf32>
    %87 = arith.addf %83, %86 : vector<1x128xf32>
    %c0_38 = arith.constant 0 : index
    %c0_39 = arith.constant 0 : index
    %88 = vector.load %arg6[%c0_38, %c0_39] : memref<1x128xf32, #tpu.memory_space<vmem>>, vector<1x128xf32>
    tpu.vector_store %arg6[%c0_38, %c0_39], %87 {strides = array<i32>} : memref<1x128xf32, #tpu.memory_space<vmem>>, vector<1x128xf32>,
    %c0_i32_40 = arith.constant 0 : i32
    %89 = arith.cmpi eq, %arg0, %c0_i32_40 : i32
    %90 = arith.extui %89 : i1 to i32
    %c0_i32_41 = arith.constant 0 : i32
    %91 = arith.cmpi ne, %90, %c0_i32_41 : i32
    scf.if %91 {
      %c0_42 = arith.constant 0 : index
      %c0_43 = arith.constant 0 : index
      %92 = vector.load %arg4[%c0_42, %c0_43] : memref<1x128xf32, #tpu.memory_space<vmem>>, vector<1x128xf32>
      %93 = vector.shape_cast %92 : vector<1x128xf32> to vector<1x1x128xf32>
      %cst_44 = arith.constant dense<0.000000e+00> : vector<1xf32>
      %94 = vector.multi_reduction <add>, %93, %cst_44 [1, 2] : vector<1x1x128xf32> to vector<1xf32>
      %95 = vector.shape_cast %94 : vector<1xf32> to vector<1x1x1xf32>
      %96 = vector.extract %95[0, 0, 0] : f32 from vector<1x1x1xf32>
      %97 = vector.broadcast %96 : f32 to vector<1x1xf32>
      %c0_45 = arith.constant 0 : index
      %c0_46 = arith.constant 0 : index
      %98 = vector.load %arg5[%c0_45, %c0_46] : memref<1x128xf32, #tpu.memory_space<vmem>>, vector<1x128xf32>
      %99 = vector.shape_cast %98 : vector<1x128xf32> to vector<1x1x128xf32>
      %cst_47 = arith.constant dense<0.000000e+00> : vector<1xf32>
      %100 = vector.multi_reduction <add>, %99, %cst_47 [1, 2] : vector<1x1x128xf32> to vector<1xf32>
      %101 = vector.shape_cast %100 : vector<1xf32> to vector<1x1x1xf32>
      %102 = vector.extract %101[0, 0, 0] : f32 from vector<1x1x1xf32>
      %103 = vector.broadcast %102 : f32 to vector<1x1xf32>
      %c0_48 = arith.constant 0 : index
      %c0_49 = arith.constant 0 : index
      %104 = vector.load %arg6[%c0_48, %c0_49] : memref<1x128xf32, #tpu.memory_space<vmem>>, vector<1x128xf32>
      %105 = vector.shape_cast %104 : vector<1x128xf32> to vector<1x1x128xf32>
      %cst_50 = arith.constant dense<0.000000e+00> : vector<1xf32>
      %106 = vector.multi_reduction <add>, %105, %cst_50 [1, 2] : vector<1x1x128xf32> to vector<1xf32>
      %107 = vector.shape_cast %106 : vector<1xf32> to vector<1x1x1xf32>
      %108 = vector.extract %107[0, 0, 0] : f32 from vector<1x1x1xf32>
      %109 = vector.broadcast %108 : f32 to vector<1x1xf32>
      %cst_51 = arith.constant 1.250000e-01 : f32
      %110 = vector.broadcast %cst_51 : f32 to vector<1x1xf32>
      %111 = arith.mulf %97, %110 : vector<1x1xf32>
      %cst_52 = arith.constant 0.000000e+00 : f32
      %112 = vector.broadcast %cst_52 : f32 to vector<1x1xf32>
      %113 = arith.cmpf ogt, %109, %112 : vector<1x1xf32>
      %cst_53 = arith.constant 1.000000e+00 : f32
      %114 = vector.broadcast %cst_53 : f32 to vector<1x1xf32>
      %115 = arith.maximumf %109, %114 : vector<1x1xf32>
      %116 = arith.divf %103, %115 : vector<1x1xf32>
      %cst_54 = arith.constant 0.000000e+00 : f32
      %117 = vector.broadcast %cst_54 : f32 to vector<1x1xf32>
      %118 = arith.select %113, %116, %117 : vector<1x1xi1>, vector<1x1xf32>
      %119 = arith.addf %111, %118 : vector<1x1xf32>
      %120 = vector.extract %119[0, 0] : f32 from vector<1x1xf32>
      %c0_55 = arith.constant 0 : index
      %c0_56 = arith.constant 0 : index
      %121 = memref.load %arg3[%c0_55, %c0_56] : memref<1x1xf32, #tpu.memory_space<smem>>
      memref.store %120, %arg3[%c0_55, %c0_56] : memref<1x1xf32, #tpu.memory_space<smem>>
    } else {
    }
    return
  }
  func.func @transform_0(%arg0: i32) -> (i32, i32, i32) {
    %c0_i32 = arith.constant 0 : i32
    %c0_i32_0 = arith.constant 0 : i32
    %c0_i32_1 = arith.constant 0 : i32
    return %c0_i32, %c0_i32_0, %arg0 : i32, i32, i32
  }
  func.func @transform_1(%arg0: i32) -> (i32, i32) {
    %c0_i32 = arith.constant 0 : i32
    %c0_i32_0 = arith.constant 0 : i32
    return %c0_i32, %arg0 : i32, i32
  }
  func.func @transform_2(%arg0: i32) -> (i32, i32) {
    %c0_i32 = arith.constant 0 : i32
    %c0_i32_0 = arith.constant 0 : i32
    %c0_i32_1 = arith.constant 0 : i32
    return %c0_i32, %c0_i32_0 : i32, i32
  }
}

</mosaic_0001>

<llo_original>
// kernel: multitask_max_margin.2
$region0: #{multitask_max_margin.2}
  #allocation0 [shape = 'u32[]', space=smem, size = 0x4, offset = 0x4, fixed_abs, tag = 'smem constant byte address 0x4 - core index']
  #allocation1 [shape = 'u32[144,128]{1,0:T(1,128)}', space=vmem, size = 0x12000, scoped, tag = 'internal scratch']
  #allocation2 [shape = 'f32[1,128]{1,0:T(1,128)}', space=vmem, size = 0x200, scoped, tag = 'scratch operand']
  #allocation3 [shape = 'f32[1,128]{1,0:T(1,128)}', space=vmem, size = 0x200, scoped, tag = 'scratch operand']
  #allocation4 [shape = 'f32[1,128]{1,0:T(1,128)}', space=vmem, size = 0x200, scoped, tag = 'scratch operand']
  #allocation5 [shape = 'u32[2048]{0}', space=vmem, size = 0x2000, scoped, tag = 'scoped memory for multitask_max_margin.2']
  #allocation6 [shape = 'u32[2048]{0}', space=vmem, size = 0x2000, scoped, tag = 'scoped memory for multitask_max_margin.2']
  #allocation7 [shape = 'u32[2048]{0}', space=vmem, size = 0x2000, scoped, tag = 'scoped memory for multitask_max_margin.2']
  #allocation8 [shape = 'u32[2048]{0}', space=vmem, size = 0x2000, scoped, tag = 'scoped memory for multitask_max_margin.2']
  #allocation9 [shape = 'u32[2048]{0}', space=vmem, size = 0x2000, scoped, tag = 'scoped memory for multitask_max_margin.2']
  #allocation10 [shape = 'u32[2048]{0}', space=vmem, size = 0x2000, scoped, tag = 'scoped memory for multitask_max_margin.2']
  #allocation11 [shape = 'u32[2048]{0}', space=vmem, size = 0x2000, scoped, tag = 'scoped memory for multitask_max_margin.2']
  #allocation12 [shape = 'u32[2048]{0}', space=vmem, size = 0x2000, scoped, tag = 'scoped memory for multitask_max_margin.2']
  #allocation13 [shape = 'u32[2048]{0}', space=vmem, size = 0x2000, scoped, tag = 'scoped memory for multitask_max_margin.2']
  #allocation14 [shape = 'u32[2048]{0}', space=vmem, size = 0x2000, scoped, tag = 'scoped memory for multitask_max_margin.2']
  #allocation15 [shape = 'u32[2048]{0}', space=vmem, size = 0x2000, scoped, tag = 'scoped memory for multitask_max_margin.2']
  #allocation16 [shape = 'u32[2048]{0}', space=vmem, size = 0x2000, scoped, tag = 'scoped memory for multitask_max_margin.2']
  #allocation17 [shape = 'u32[2048]{0}', space=vmem, size = 0x2000, scoped, tag = 'scoped memory for multitask_max_margin.2']
  #allocation18 [shape = 'u32[2048]{0}', space=vmem, size = 0x2000, scoped, tag = 'scoped memory for multitask_max_margin.2']
  #allocation19 [shape = 'u32[2048]{0}', space=vmem, size = 0x2000, scoped, tag = 'scoped memory for multitask_max_margin.2']
  #allocation20 [shape = 'u32[2048]{0}', space=vmem, size = 0x2000, scoped, tag = 'scoped memory for multitask_max_margin.2']
  #allocation21 [shape = 'u32[2048]{0}', space=vmem, size = 0x2000, scoped, tag = 'scoped memory for multitask_max_margin.2']
  #allocation22 [shape = 'u32[2048]{0}', space=vmem, size = 0x2000, scoped, tag = 'scoped memory for multitask_max_margin.2']
  #allocation23 [shape = 'u32[2048]{0}', space=vmem, size = 0x2000, scoped, tag = 'scoped memory for multitask_max_margin.2']
  #allocation24 [shape = 'u32[2048]{0}', space=vmem, size = 0x2000, scoped, tag = 'scoped memory for multitask_max_margin.2']
  #allocation25 [shape = 'u32[2048]{0}', space=vmem, size = 0x2000, scoped, tag = 'scoped memory for multitask_max_margin.2']
  #allocation26 [shape = 'u32[2048]{0}', space=vmem, size = 0x2000, scoped, tag = 'scoped memory for multitask_max_margin.2']
  #allocation27 [shape = 'u32[2048]{0}', space=vmem, size = 0x2000, scoped, tag = 'scoped memory for multitask_max_margin.2']
  #allocation28 [shape = 'u32[2048]{0}', space=vmem, size = 0x2000, scoped, tag = 'scoped memory for multitask_max_margin.2']
  #allocation29 [shape = 'u32[2048]{0}', space=vmem, size = 0x2000, scoped, tag = 'scoped memory for multitask_max_margin.2']
  %s0 = inlined_call_operand.vmem [shape: f32[1,128,16], index: 0, kind: input, shape index: {}]
  %s1 = inlined_call_operand.<no memory space> [shape: f32[], index: 1, kind: input, shape index: {}]
  %s2 = inlined_call_operand.vmem [shape: f32[1,128,16], index: 2, kind: input, shape index: {}]
  %s3 = inlined_call_operand.vmem [shape: f32[1,128,16], index: 3, kind: input, shape index: {}]
  %s4 = inlined_call_operand.vmem [shape: s32[1,128], index: 4, kind: input, shape index: {}]
  %s5 = inlined_call_operand.<no memory space> [shape: s32[], index: 5, kind: input, shape index: {}]
  %s6 = inlined_call_operand.vmem [shape: s32[1,128], index: 6, kind: input, shape index: {}]
  %s7 = inlined_call_operand.hbm [shape: f32[1,1], index: 7, kind: output, shape index: {}]
  %s8 = sld [smem:[#allocation0]]
  $region38: #{multitask_max_margin.2} parent=0
    _
  %s10 = ssub.s32 1, %s8
  %s11 = scalar_select 0, %s10, %s8
  %v12 = vstv %s1
  %v13 = vstv %s1
  %v14 = vstv %s1
  %v15 = vstv %s5
  %v16 = vstv %s5
  $region1: #{multitask_max_margin.2} parent=0
    #allocation30 [shape = 'u8[512]{0}', space=smem, size = 0x200, scoped, tag = 'output window, operand 0, single buffered']
    #allocation31 [shape = 's32[1]{0}', space=sflag, size = 0x4, scoped, tag = 'scoped memory for multitask_max_margin.2']
    #allocation32 [shape = 'u8[24576]{0}', space=vmem, size = 0x6000, dematerialized = true, scoped, tag = 'FusionAdapter Buffer %maximum_bitcast_fusion.1 = f32[3,16,128]{2,1,0:T(8,128)} fusion(%param_0.20, %param_1.18, %param_2.6, %param_3.6), kind=kLoop, calls=%fused_computation.clone.clone, metadata={op_name="jit(multitask_max_margin)/transpose" stack_frame_id=16}']
    #allocation33 [shape = 'u8[1024]{0}', space=vmem, size = 0x400, dematerialized = true, scoped, tag = 'FusionAdapter Buffer %fusion.5 = s32[2,128]{1,0:T(2,128)} fusion(%param_4.4, %param_5.2, %param_6.1), kind=kLoop, calls=%fused_computation.9.clone, metadata={op_name="jit(multitask_max_margin)/concatenate" stack_frame_id=19}']
    %17 = vsyncpa [#allocation31], 0
    // Predicated region
    $region2: #{multitask_max_margin.2} parent=1 // pred_check
      _
    $region3: #{multitask_max_margin.2} parent=1 // pred_check_branch
      %19 = sbr.rel (0) target = $region5
    $region4: #{multitask_max_margin.2} parent=1 // pred_region
      %s21 = ssub.s32 1, 0
      %s22 = smul.u32 128, %s21
      %s23 = smul.u32 %s22, 2
      %p24 = scmp.lt.s32.totalorder 0, 0
      %s25 = scalar_select %p24, 0, 0
      %s26 = smul.addr %s25, 2
      %s27 = smul.addr %s26, 8
      %s28 = scalar_lea.vmem %s0, %s27
      %s30 = ssub.s32 1, 0
      %s31 = smul.u32 128, %s30
      %s32 = smul.u32 %s31, 2
    $region5: #{multitask_max_margin.2} parent=1 // pred_fallthru
      _
    // Predicated region
    $region6: #{multitask_max_margin.2} parent=1 // pred_check
      _
    $region7: #{multitask_max_margin.2} parent=1 // pred_check_branch
      %34 = sbr.rel (0) target = $region9
    $region8: #{multitask_max_margin.2} parent=1 // pred_region
      %s36 = ssub.s32 1, 0
      %s37 = smul.u32 128, %s36
      %s38 = smul.u32 %s37, 2
      %p39 = scmp.lt.s32.totalorder 0, 0
      %s40 = scalar_select %p39, 0, 0
      %s41 = smul.addr %s40, 2
      %s42 = smul.addr %s41, 8
      %s43 = scalar_lea.vmem %s2, %s42
      %s45 = ssub.s32 1, 0
      %s46 = smul.u32 128, %s45
      %s47 = smul.u32 %s46, 2
    $region9: #{multitask_max_margin.2} parent=1 // pred_fallthru
      _
    // Predicated region
    $region10: #{multitask_max_margin.2} parent=1 // pred_check
      _
    $region11: #{multitask_max_margin.2} parent=1 // pred_check_branch
      %49 = sbr.rel (0) target = $region13
    $region12: #{multitask_max_margin.2} parent=1 // pred_region
      _
    $region13: #{multitask_max_margin.2} parent=1 // pred_fallthru
      _
    // Predicated region
    $region14: #{multitask_max_margin.2} parent=1 // pred_check
      _
    $region15: #{multitask_max_margin.2} parent=1 // pred_check_branch
      %51 = sbr.rel (0) target = $region17
    $region16: #{multitask_max_margin.2} parent=1 // pred_region
      %s53 = ssub.s32 1, 0
      %s54 = smul.u32 16, %s53
      %p55 = scmp.lt.s32.totalorder 0, 0
      %s56 = scalar_select %p55, 0, 0
      %s57 = scalar_lea.vmem %s4, %s56
      %s59 = ssub.s32 1, 0
      %s60 = smul.u32 16, %s59
    $region17: #{multitask_max_margin.2} parent=1 // pred_fallthru
      _
    // Predicated region
    $region18: #{multitask_max_margin.2} parent=1 // pred_check
      _
    $region19: #{multitask_max_margin.2} parent=1 // pred_check_branch
      %62 = sbr.rel (0) target = $region21
    $region20: #{multitask_max_margin.2} parent=1 // pred_region
      _
    $region21: #{multitask_max_margin.2} parent=1 // pred_fallthru
      _
    %s64 = ssub.s32 1, 0
    %s65 = smul.u32 128, %s64
    %s66 = smul.u32 %s65, 2
    %p67 = scmp.lt.s32.totalorder 0, 0
    %s68 = scalar_select %p67, 0, 0
    %s69 = smul.addr %s68, 2
    %s70 = smul.addr %s69, 8
    %s71 = scalar_lea.vmem %s0, %s70
    %s73 = ssub.s32 1, 0
    %s74 = smul.u32 128, %s73
    %s75 = smul.u32 %s74, 2
    %p76 = scmp.lt.s32.totalorder 0, 0
    %s77 = scalar_select %p76, 0, 0
    %s78 = smul.addr %s77, 2
    %s79 = smul.addr %s78, 8
    %s80 = scalar_lea.vmem %s2, %s79
    %s82 = ssub.s32 1, 0
    %s83 = smul.u32 16, %s82
    %p84 = scmp.lt.s32.totalorder 0, 0
    %s85 = scalar_select %p84, 0, 0
    %s86 = scalar_lea.vmem %s4, %s85
    %s88 = ssub.s32 1, 0
    %s89 = smul.u32 128, %s88
    %s90 = smul.u32 %s89, 2
    %p91 = scmp.lt.s32.totalorder 0, 0
    %s92 = scalar_select %p91, 0, 0
    %s93 = smul.addr %s92, 2
    %s94 = smul.addr %s93, 8
    %s95 = scalar_lea.vmem %s0, %s94
    %s97 = ssub.s32 1, 0
    %s98 = smul.u32 128, %s97
    %s99 = smul.u32 %s98, 2
    %s101 = ssub.s32 1, 0
    %s102 = smul.u32 128, %s101
    %s103 = smul.u32 %s102, 2
    %p104 = scmp.lt.s32.totalorder 0, 0
    %s105 = scalar_select %p104, 0, 0
    %s106 = smul.addr %s105, 2
    %s107 = smul.addr %s106, 8
    %s108 = scalar_lea.vmem %s2, %s107
    %s110 = ssub.s32 1, 0
    %s111 = smul.u32 128, %s110
    %s112 = smul.u32 %s111, 2
    %s114 = ssub.s32 1, 0
    %s115 = smul.u32 16, %s114
    %p116 = scmp.lt.s32.totalorder 0, 0
    %s117 = scalar_select %p116, 0, 0
    %s118 = scalar_lea.vmem %s4, %s117
    %s120 = ssub.s32 1, 0
    %s121 = smul.u32 16, %s120
    %s122 = ssub.s32 0, 0
    %p123 = scmp.lt.s32.totalorder %s122, 0
    %s124 = scalar_select %p123, 0, 255
    %v125 = vld [vmem:[%s95] sm:%s124]
    %s126 = ssub.s32 0, 0
    %p127 = scmp.lt.s32.totalorder %s126, 0
    %s128 = scalar_select %p127, 0, 255
    %v129 = vld [vmem:[%s108] sm:%s128]
    %v130 = vld [vmem:[%s3] sm:$0xff]
    %131 = xla_tuple %v130, %v13
    %132 = xla_tuple %131
    %v133 = vmax.f32 %v130, %v13
    %134 = xla_tuple %v133
    %135 = xla_tuple %v133, %v12
    %136 = xla_tuple %135
    %v137 = vmax.f32 %v133, %v12
    %138 = xla_tuple %v137
    %140 = vst [vmem:[#allocation32] sm:$0xff] %v137
    %s141 = scalar_lea.vmem %s95, 8
    %s142 = ssub.s32 0, 0
    %p143 = scmp.lt.s32.totalorder %s142, 0
    %s144 = scalar_select %p143, 0, 255
    %v145 = vld [vmem:[%s141] sm:%s144]
    %s146 = scalar_lea.vmem %s108, 8
    %s147 = ssub.s32 0, 0
    %p148 = scmp.lt.s32.totalorder %s147, 0
    %s149 = scalar_select %p148, 0, 255
    %v150 = vld [vmem:[%s146] sm:%s149]
    %s151 = scalar_lea.vmem %s3, 8
    %v152 = vld [vmem:[%s151] sm:$0xff]
    %153 = xla_tuple %v152, %v13
    %154 = xla_tuple %153
    %v155 = vmax.f32 %v152, %v13
    %156 = xla_tuple %v155
    %157 = xla_tuple %v155, %v12
    %158 = xla_tuple %157
    %v159 = vmax.f32 %v155, %v12
    %160 = xla_tuple %v159
    %s161 = scalar_lea.vmem [#allocation32], 8
    %163 = vst [vmem:[%s161] sm:$0xff] %v159
    %164 = xla_tuple %v14, %v129
    %165 = xla_tuple %164
    %v166 = vmax.f32 %v14, %v129
    %167 = xla_tuple %v166
    %168 = xla_tuple %v166, %v12
    %169 = xla_tuple %168
    %v170 = vmax.f32 %v166, %v12
    %171 = xla_tuple %v170
    %s172 = scalar_lea.vmem [#allocation32], 16
    %174 = vst [vmem:[%s172] sm:$0xff] %v170
    %s175 = scalar_lea.vmem %s95, 8
    %s176 = scalar_lea.vmem %s108, 8
    %177 = xla_tuple %v14, %v150
    %178 = xla_tuple %177
    %v179 = vmax.f32 %v14, %v150
    %180 = xla_tuple %v179
    %181 = xla_tuple %v179, %v12
    %182 = xla_tuple %181
    %v183 = vmax.f32 %v179, %v12
    %184 = xla_tuple %v183
    %s185 = scalar_lea.vmem [#allocation32], 24
    %187 = vst [vmem:[%s185] sm:$0xff] %v183
    %188 = xla_tuple %v14, %v13
    %189 = xla_tuple %188
    %v190 = vmax.f32 %v14, %v13
    %191 = xla_tuple %v190
    %192 = xla_tuple %v190, %v125
    %193 = xla_tuple %192
    %v194 = vmax.f32 %v190, %v125
    %195 = xla_tuple %v194
    %s196 = scalar_lea.vmem [#allocation32], 32
    %198 = vst [vmem:[%s196] sm:$0xff] %v194
    %s199 = scalar_lea.vmem %s95, 8
    %s200 = scalar_lea.vmem %s108, 8
    %201 = xla_tuple %v14, %v13
    %202 = xla_tuple %201
    %v203 = vmax.f32 %v14, %v13
    %204 = xla_tuple %v203
    %205 = xla_tuple %v203, %v145
    %206 = xla_tuple %205
    %v207 = vmax.f32 %v203, %v145
    %208 = xla_tuple %v207
    %s209 = scalar_lea.vmem [#allocation32], 40
    %211 = vst [vmem:[%s209] sm:$0xff] %v207
    %s212 = ssub.s32 0, 0
    %p213 = scmp.lt.s32.totalorder %s212, 0
    %s214 = scalar_select %p213, 0, 255
    %s215 = sand.u32 1, %s214
    %s216 = sand.u32 1, %s215
    %v217 = vld [vmem:[%s118] sm:%s216]
    %v218 = vlaneseq
    %v219 = vshrl.u32 %v218, 7
    %v220 = vadd.s32 %v219, 8
    %vm221 = vcmp.lt.s32.totalorder %v220, 9
    %v222 = vsel %vm221, %v217, %v15
    %vm223 = vcmask 1046528
    %v224 = vsel %vm223, %v222, %v15
    %v225 = vrot.slane %v224, 7
    %v226 = vld [vmem:[%s6] sm:$0x1]
    %v227 = vlaneseq
    %v228 = vshrl.u32 %v227, 7
    %vm230 = vcmp.lt.s32.totalorder %v228, 1
    %v231 = vsel %vm230, %v226, %v16
    %232 = xla_tuple %v231, %v225
    %233 = xla_tuple %232
    %v234 = vadd.s32 %v231, %v225
    %235 = xla_tuple %v234
    %237 = vst [vmem:[#allocation33] sm:$0x3] %v234
    %p238 = scmp.eq.s32.totalorder 0, 0
    // Predicated region
    $region22: #{multitask_max_margin.2} parent=1 // pred_check
      %p239 = pneg %p238
    $region23: #{multitask_max_margin.2} parent=1 // pred_check_branch
      %241 = sbr.rel (%p239) target = $region25
    $region24: #{multitask_max_margin.2} parent=1 // pred_region
      %242 = vst [vmem:[#allocation2] sm:$0x1] 0.0
      %243 = vst [vmem:[#allocation3] sm:$0x1] 0.0
      %244 = vst [vmem:[#allocation4] sm:$0x1] 0.0
    $region25: #{multitask_max_margin.2} parent=1 // pred_fallthru
      _
    %v245 = vlaneseq
    %v246 = vand.u32 %v245, 127
    %s247 = smul.u32 0, 128
    %v248 = vstv %s247
    %v249 = vadd.s32 %v248, %v246
    %vm250 = vcmp.lt.s32.totalorder %v249, 8
    %v251 = vlaneseq
    %v252 = vshrl.u32 %v251, 7
    %v253 = vadd.s32 %v252, 8
    %v254 = vld [vmem:[#allocation33] sm:$0x3]
    %v255 = vld [vmem:[#allocation32] sm:$0xff]
    %v256 = vld [vmem:[#allocation32 + $0x8] sm:$0xff]
    %v257 = vld [vmem:[#allocation32 + $0x10] sm:$0xff]
    %v258 = vld [vmem:[#allocation32 + $0x18] sm:$0xff]
    %v259 = vmul.f32 %v255, 0.5
    %v260 = vmul.f32 %v256, 0.5
    %v261 = vmul.f32 %v257, 0.5
    %v262 = vmul.f32 %v258, 0.5
    %v263 = vtanh.pop %v259
    %v264 = vtanh.pop %v260
    %v265 = vtanh.pop %v261
    %v266 = vtanh.pop %v262
    %v267 = vadd.f32 %v263, 1.0
    %v268 = vadd.f32 %v264, 1.0
    %v269 = vadd.f32 %v265, 1.0
    %v270 = vadd.f32 %v266, 1.0
    %v271 = vmul.f32 %v267, 0.5
    %v272 = vmul.f32 %v268, 0.5
    %v273 = vmul.f32 %v269, 0.5
    %v274 = vmul.f32 %v270, 0.5
    %s275 = scalar_lea.vmem [#allocation32], 32
    %v276 = vld [vmem:[%s275] sm:$0xff]
    %v277 = vld [vmem:[%s275 + $0x8] sm:$0xff]
    %v278 = vlaneseq
    %v279 = vshrl.u32 %v278, 7
    %v280 = vsub.s32 0, %v279
    %v281 = vrot.slane %v254, %v280
    %vm282 = vcmp.eq.s32.totalorder %v252, %v281
    %vm283 = vcmp.eq.s32.totalorder %v253, %v281
    %v284 = vsel %vm282, %v271, 0.0
    %v285 = vsel %vm283, %v272, 0.0
    %v286 = vadd.f32 %v284, %v285
    %v287 = vrot.slane %v286, 4
    %v288 = vadd.f32 %v286, %v287
    %v289 = vrot.slane %v288, 2
    %v290 = vadd.f32 %v288, %v289
    %v291 = vrot.slane %v290, 1
    %v292 = vadd.f32 %v290, %v291
    %vm293 = vmxor %vm282, 1
    %vm294 = vmxor %vm283, 1
    %vm295 = vcmp.gt.f32.partialorder %v276, 0.0
    %vm296 = vcmp.gt.f32.partialorder %v277, 0.0
    %vm297 = vmand %vm293, %vm295
    %vm298 = vmand %vm294, %vm296
    %vm299 = vcmp.lt.s32.totalorder %v252, 16
    %vm300 = vcmp.lt.s32.totalorder %v253, 16
    %v301 = vsel %vm250, 1, 0
    %vm302 = vcmp.eq.s32.totalorder %v301, 1
    %vm303 = vmand %vm302, %vm299
    %vm304 = vmand %vm302, %vm300
    %vm305 = vmand %vm297, %vm303
    %vm306 = vmand %vm298, %vm304
    %v307 = vsub.f32 0.5, %v292
    %v308 = vadd.f32 %v307, %v271
    %v309 = vadd.f32 %v307, %v272
    %v310 = vmax.f32 %v308, 0.0
    %v311 = vmax.f32 %v309, 0.0
    %v312 = vsel %vm305, %v310, 0.0
    %v313 = vsel %vm306, %v311, 0.0
    %v314 = vld [vmem:[#allocation2] sm:$0x1]
    %v315 = vadd.f32 %v312, %v313
    %v316 = vrot.slane %v315, 4
    %v317 = vadd.f32 %v315, %v316
    %v318 = vrot.slane %v317, 2
    %v319 = vadd.f32 %v317, %v318
    %v320 = vrot.slane %v319, 1
    %v321 = vadd.f32 %v319, %v320
    %v322 = vadd.f32 %v314, %v321
    %323 = vst [vmem:[#allocation2] sm:$0x1] %v322
    %vm324 = vcmp.ne.s32.totalorder %v254, 8
    %vm325 = vmand %vm324, %vm250
    %v326 = vlaneseq
    %v327 = vshrl.u32 %v326, 7
    %v328 = vsub.s32 1, %v327
    %v329 = vrot.slane %v254, %v328
    %vm330 = vcmp.eq.s32.totalorder %v252, %v329
    %vm331 = vcmp.eq.s32.totalorder %v253, %v329
    %v332 = vsel %vm330, %v273, 0.0
    %v333 = vsel %vm331, %v274, 0.0
    %v334 = vadd.f32 %v332, %v333
    %v335 = vrot.slane %v334, 4
    %v336 = vadd.f32 %v334, %v335
    %v337 = vrot.slane %v336, 2
    %v338 = vadd.f32 %v336, %v337
    %v339 = vrot.slane %v338, 1
    %v340 = vadd.f32 %v338, %v339
    %vm341 = vmxor %vm330, 1
    %vm342 = vmxor %vm331, 1
    %v343 = vsel %vm325, 1, 0
    %v344 = vlaneseq
    %v345 = vshrl.u32 %v344, 7
    %v346 = vsub.s32 1, %v345
    %v347 = vrot.slane %v343, %v346
    %vm348 = vcmp.eq.s32.totalorder %v347, 1
    %vm349 = vmand %vm341, %vm348
    %vm350 = vmand %vm342, %vm348
    %vm351 = vcmp.lt.s32.totalorder %v252, 8
    %vm352 = vcmp.lt.s32.totalorder %v253, 8
    %vm353 = vmand %vm349, %vm351
    %vm354 = vmand %vm350, %vm352
    %v355 = vsub.f32 0.5, %v340
    %v356 = vadd.f32 %v355, %v273
    %v357 = vadd.f32 %v355, %v274
    %v358 = vmax.f32 %v356, 0.0
    %v359 = vmax.f32 %v357, 0.0
    %v360 = vsel %vm353, %v358, 0.0
    %v361 = vsel %vm354, %v359, 0.0
    %v362 = vld [vmem:[#allocation3] sm:$0x1]
    %v363 = vadd.f32 %v360, %v361
    %v364 = vrot.slane %v363, 4
    %v365 = vadd.f32 %v363, %v364
    %v366 = vrot.slane %v365, 2
    %v367 = vadd.f32 %v365, %v366
    %v368 = vrot.slane %v367, 1
    %v369 = vadd.f32 %v367, %v368
    %v370 = vadd.f32 %v362, %v369
    %371 = vst [vmem:[#allocation3] sm:$0x1] %v370
    %v372 = vld [vmem:[#allocation4] sm:$0x1]
    %v373 = vsel %vm325, 1.0, 0.0
    %v376 = vunpack.c.l.s4 1966171168
    %v377 = vunpack.c.0.s8 %v376
    %v378 = vlaneseq
    %v379 = vshrl.u32 %v378, 7
    %v380 = vsub.s32 %v377, %v379
    %v381 = vrot.slane %v373, %v380
    %v382 = vcombine.high %v381, %v381
    %v384 = vunpack.c.l.s4 1966171168
    %v385 = vunpack.c.0.s8 %v384
    %v386 = vlaneseq
    %v387 = vshrl.u32 %v386, 7
    %v388 = vsub.s32 %v385, %v387
    %v389 = vrot.slane %v382, %v388
    %v391 = vadd.f32 %v372, %v389
    %392 = vst [vmem:[#allocation4] sm:$0x1] %v391
    // Predicated region
    $region26: #{multitask_max_margin.2} parent=1 // pred_check
      %p393 = pneg %p238
    $region27: #{multitask_max_margin.2} parent=1 // pred_check_branch
      %395 = sbr.rel (%p393) target = $region29
    $region28: #{multitask_max_margin.2} parent=1 // pred_region
      %v396 = vld [vmem:[#allocation2] sm:$0x1]
      %vm397 = vcmask 1040384
      %v398 = vsel %vm397, %v396, 0.0
      %399 = vadd.xlane.f32.xlu0 %v398
      %v400 = vpop.xlane.xlu0 %399
      %v401 = vrot.slane %v400, 4
      %v402 = vadd.f32 %v400, %v401
      %v403 = vrot.slane %v402, 2
      %v404 = vadd.f32 %v402, %v403
      %v405 = vrot.slane %v404, 1
      %v406 = vadd.f32 %v404, %v405
      %s407 = vtos %v406
      %v408 = vstv %s407
      %v409 = vld [vmem:[#allocation3] sm:$0x1]
      %v410 = vsel %vm397, %v409, 0.0
      %411 = vadd.xlane.f32.xlu0 %v410
      %v412 = vpop.xlane.xlu0 %411
      %v413 = vrot.slane %v412, 4
      %v414 = vadd.f32 %v412, %v413
      %v415 = vrot.slane %v414, 2
      %v416 = vadd.f32 %v414, %v415
      %v417 = vrot.slane %v416, 1
      %v418 = vadd.f32 %v416, %v417
      %s419 = vtos %v418
      %v420 = vstv %s419
      %v421 = vld [vmem:[#allocation4] sm:$0x1]
      %v422 = vsel %vm397, %v421, 0.0
      %423 = vadd.xlane.f32.xlu0 %v422
      %v424 = vpop.xlane.xlu0 %423
      %v425 = vrot.slane %v424, 4
      %v426 = vadd.f32 %v424, %v425
      %v427 = vrot.slane %v426, 2
      %v428 = vadd.f32 %v426, %v427
      %v429 = vrot.slane %v428, 1
      %v430 = vadd.f32 %v428, %v429
      %s431 = vtos %v430
      %v432 = vstv %s431
      %v433 = vmul.f32 %v408, 0.125
      %vm434 = vcmp.gt.f32.partialorder %v432, 0.0
      %v435 = vmax.f32 %v432, 1.0
      %v436 = vrcp.pop %v435
      %v437 = vmul.f32 %v420, %v436
      %v438 = vsel %vm434, %v437, 0.0
      %v439 = vadd.f32 %v433, %v438
      %s440 = vtos %v439
      %s441 = scalar_lea.smem [#allocation30], 0
      %442 = sst [smem:[%s441]] %s440
    $region29: #{multitask_max_margin.2} parent=1 // pred_fallthru
      _
    // Predicated region
    $region30: #{multitask_max_margin.2} parent=1 // pred_check
      _
    $region31: #{multitask_max_margin.2} parent=1 // pred_check_branch
      %444 = sbr.rel (0) target = $region33
    $region32: #{multitask_max_margin.2} parent=1 // pred_region
      %s446 = ssub.s32 16, 16
      %447 = vsyncadd [#allocation31], %s446
      %450 = dma.smem_to_hbm [#allocation30], 16, %s7, [#allocation31]
    $region33: #{multitask_max_margin.2} parent=1 // pred_fallthru
      _
    // Predicated region
    $region34: #{multitask_max_margin.2} parent=1 // pred_check
      _
    $region35: #{multitask_max_margin.2} parent=1 // pred_check_branch
      %452 = sbr.rel (0) target = $region37
    $region36: #{multitask_max_margin.2} parent=1 // pred_region
      %453 = dma.done [#allocation31], 16
    $region37: #{multitask_max_margin.2} parent=1 // pred_fallthru
      _
    %454 = sfence
    %455 = vsyncpa [#allocation31], 1

</llo_original>
